<compile_context>
chip_gen: v7x
topology: tpu7x:2x2x1
jax: 0.10.0
libtpu: 0.0.40
codegen_flags: <defaults>
</compile_context>

<pallas_src>
import functools

import jax
import jax.numpy as jnp
from jax.experimental import pallas as pl
from jax.experimental.pallas import tpu as pltpu


# --------------------------------------------------------------------------- #
# Prologue: fused q/k/v 1x1-conv projections — one pass over x, bf16 outputs.
# --------------------------------------------------------------------------- #
def _qkv_projection_kernel(x_ref, wq_ref, bq_ref, wk_ref, bk_ref, wv_ref, bv_ref,
                           q_ref, k_ref, v_ref):
    cdt = wq_ref.dtype                               # MXU compute dtype (bf16 or f32)
    x_t = x_ref[...].astype(cdt)                     # (C, tn)
    q = jnp.dot(wq_ref[...], x_t, preferred_element_type=jnp.float32) + bq_ref[...]
    k = jnp.dot(wk_ref[...], x_t, preferred_element_type=jnp.float32) + bk_ref[...]
    v = jnp.dot(wv_ref[...], x_t, preferred_element_type=jnp.float32) + bv_ref[...]
    q_ref[...] = q.astype(q_ref.dtype)
    k_ref[...] = k.astype(k_ref.dtype)
    v_ref[...] = v.astype(v_ref.dtype)


# --------------------------------------------------------------------------- #
# Flash-style attention + gamma residual.
# --------------------------------------------------------------------------- #
def _flash_attention_kernel(q_ref, k_ref, v_ref, x_ref, gamma_ref, out_ref,
                            m_scr, l_scr, acc_scr, *, n_valid):
    ki = pl.program_id(2)
    nk = pl.num_programs(2)
    tk = k_ref.shape[-1]

    @pl.when(ki == 0)
    def _init():
        m_scr[...] = jnp.full_like(m_scr, -jnp.inf)
        l_scr[...] = jnp.zeros_like(l_scr)
        acc_scr[...] = jnp.zeros_like(acc_scr)

    # energy tile: s[j, i] = sum_c k[c, j] * q[c, i] == energy[i, j] -> (tk, tq)
    # (contraction over dim 0 of both operands; nothing is transposed / XLU-free)
    s = jax.lax.dot_general(k_ref[...], q_ref[...],
                            (((0,), (0,)), ((), ())),
                            preferred_element_type=jnp.float32)

    if n_valid is not None:                           # static: sequence was padded
        key_idx = ki * tk + jax.lax.broadcasted_iota(jnp.int32, s.shape, 0)
        s = jnp.where(key_idx < n_valid, s, -jnp.inf)

    # Online softmax over the key axis (axis 0 of s); stats are (1, tq) in f32.
    m_prev = m_scr[...]
    m_new = jnp.maximum(m_prev, jnp.max(s, axis=0, keepdims=True))        # (1, tq)
    alpha = jnp.exp(m_prev - m_new)                                       # (1, tq)
    p = jnp.exp(s - m_new)                                                # (tk, tq)

    l_scr[...] = alpha * l_scr[...] + jnp.sum(p, axis=0, keepdims=True)
    # out[c, i] += sum_j v[c, j] * p[j, i]  (plain matmul, contraction over tk)
    acc_scr[...] = alpha * acc_scr[...] + jnp.dot(
        v_ref[...], p.astype(v_ref.dtype), preferred_element_type=jnp.float32)
    m_scr[...] = m_new

    @pl.when(ki == nk - 1)
    def _finalize():
        approx = (q_ref.dtype == jnp.bfloat16)        # trace-time: EUP recip in bf16 mode
        inv_l = pl.reciprocal(l_scr[...], approx=approx)                  # (1, tq)
        gamma = gamma_ref[0]                                              # SMEM scalar
        out_ref[...] = (gamma * (acc_scr[...] * inv_l)
                        + x_ref[...].astype(jnp.float32)).astype(out_ref.dtype)


# --------------------------------------------------------------------------- #
# Lane-safe tile selection.
# --------------------------------------------------------------------------- #
def _round_up(x, m):
    return ((x + m - 1) // m) * m


def _pick_tile(n_pad, cap):
    """Largest multiple of 128 that divides n_pad and is <= cap (always >= 128)."""
    cap = max(128, (cap // 128) * 128)
    best = 128                        # 128 always divides n_pad (n_pad % 128 == 0)
    t = 256
    while t <= cap:
        if n_pad % t == 0:
            best = t
        t += 128
    return best


def _choose_tiles(N, tq_cap, tk_cap, *, split_queries):
    """N <= 128 -> one full-dim tile (no pad); otherwise pad N to a multiple of
    128 and pick 128-multiple tiles dividing the padded length (lane-dense)."""
    if N <= 128:
        return N, N, N
    n_pad = _round_up(N, 128)
    q_cap = tq_cap
    if split_queries and n_pad >= 256:
        q_cap = min(q_cap, n_pad // 2)   # >= 2 query tiles: keep both v7x TCs busy
    return n_pad, _pick_tile(n_pad, q_cap), _pick_tile(n_pad, tk_cap)


# --------------------------------------------------------------------------- #
# Wrapper.
# --------------------------------------------------------------------------- #
def self_attention(x, wq, bq, wk, bk, wv, bv, gamma, *,
                   mxu_dtype=jnp.bfloat16, tq_cap=256, tk_cap=512,
                   kv_pipeline_depth=None, vmem_limit_bytes=None):
    """out = gamma * (softmax(q^T k) applied to v) + x   (PyTorch SelfAttention).

    x: (B, C, N) f32.  mxu_dtype=bf16 (default, fast) or f32 (tight numerics).
    Per-generation tuning: v6e can use tq_cap=512/tk_cap=1024; v5e prefers
    tk_cap<=256 (EUP-bound exp stream, single vst slot); on v7x check
    vmem_limit_bytes for very large C (64 MiB VMEM).
    """
    B, C, N = x.shape
    Cq = wq.shape[0]

    n_pad, tq, tk = _choose_tiles(N, tq_cap, tk_cap, split_queries=(B == 1))
    needs_pad = n_pad != N
    x_p = jnp.pad(x, ((0, 0), (0, 0), (0, n_pad - N))) if needs_pad else x

    # Weights cast once in the wrapper (halves weight DMA in bf16); biases stay f32.
    wq_c = wq.astype(mxu_dtype)
    wk_c = wk.astype(mxu_dtype)
    wv_c = wv.astype(mxu_dtype)
    bq2 = bq.reshape(Cq, 1).astype(jnp.float32)
    bk2 = bk.reshape(Cq, 1).astype(jnp.float32)
    bv2 = bv.reshape(C, 1).astype(jnp.float32)
    g1 = gamma.reshape(1).astype(jnp.float32)

    # ---- prologue: project q/k/v once (single fused pass over x) --------------
    tn = tk
    qkv_bcast = lambda shape: pl.BlockSpec(shape, lambda b, ni: (0, 0))
    seq_spec = lambda ch: pl.BlockSpec((None, ch, tn), lambda b, ni: (b, 0, ni))
    q_p, k_p, v_p = pl.pallas_call(
        _qkv_projection_kernel,
        out_shape=(jax.ShapeDtypeStruct((B, Cq, n_pad), mxu_dtype),
                   jax.ShapeDtypeStruct((B, Cq, n_pad), mxu_dtype),
                   jax.ShapeDtypeStruct((B, C, n_pad), mxu_dtype)),
        grid_spec=pltpu.PrefetchScalarGridSpec(
            num_scalar_prefetch=0,
            grid=(B, n_pad // tn),
            in_specs=[seq_spec(C),                       # x tile
                      qkv_bcast((Cq, C)), qkv_bcast((Cq, 1)),   # wq, bq
                      qkv_bcast((Cq, C)), qkv_bcast((Cq, 1)),   # wk, bk
                      qkv_bcast((C, C)), qkv_bcast((C, 1))],    # wv, bv
            out_specs=[seq_spec(Cq), seq_spec(Cq), seq_spec(C)],
        ),
        compiler_params=pltpu.CompilerParams(
            dimension_semantics=("parallel", "parallel")),
    )(x_p, wq_c, bq2, wk_c, bk2, wv_c, bv2)

    # ---- flash attention + gamma residual --------------------------------------
    kv_kwargs = {}
    if kv_pipeline_depth is not None and kv_pipeline_depth != 2:
        kv_kwargs = dict(pipeline_mode=pl.Buffered(kv_pipeline_depth))

    q_spec = pl.BlockSpec((None, Cq, tq), lambda b, qi, ki: (b, 0, qi))
    k_spec = pl.BlockSpec((None, Cq, tk), lambda b, qi, ki: (b, 0, ki), **kv_kwargs)
    v_spec = pl.BlockSpec((None, C, tk), lambda b, qi, ki: (b, 0, ki), **kv_kwargs)
    x_spec = pl.BlockSpec((None, C, tq), lambda b, qi, ki: (b, 0, qi))
    out_spec = pl.BlockSpec((None, C, tq), lambda b, qi, ki: (b, 0, qi))

    cp_kwargs = dict(dimension_semantics=("parallel", "parallel", "arbitrary"))
    if vmem_limit_bytes is not None:
        cp_kwargs["vmem_limit_bytes"] = vmem_limit_bytes

    kernel = functools.partial(_flash_attention_kernel,
                               n_valid=(N if needs_pad else None))

    out_p = pl.pallas_call(
        kernel,
        out_shape=jax.ShapeDtypeStruct((B, C, n_pad), x.dtype),
        grid_spec=pltpu.PrefetchScalarGridSpec(
            num_scalar_prefetch=0,
            grid=(B, n_pad // tq, n_pad // tk),
            in_specs=[q_spec, k_spec, v_spec, x_spec,
                      pl.BlockSpec(memory_space=pltpu.MemorySpace.SMEM)],  # gamma
            out_specs=out_spec,
            scratch_shapes=[
                pltpu.VMEM((1, tq), jnp.float32),   # running max m
                pltpu.VMEM((1, tq), jnp.float32),   # running denom l
                pltpu.VMEM((C, tq), jnp.float32),   # output accumulator
            ],
        ),
        compiler_params=pltpu.CompilerParams(**cp_kwargs),
    )(q_p, k_p, v_p, x_p, g1)

    return out_p[:, :, :N] if needs_pad else out_p


# --------------------------------------------------------------------------- #
# Pure-JAX reference mirroring the PyTorch forward.
# --------------------------------------------------------------------------- #
def self_attention_ref(x, wq, bq, wk, bk, wv, bv, gamma):
    q = jnp.einsum("oc,bcn->bon", wq, x) + bq[None, :, None]      # (B, Cq, N)
    k = jnp.einsum("oc,bcn->bon", wk, x) + bk[None, :, None]      # (B, Cq, N)
    v = jnp.einsum("oc,bcn->bon", wv, x) + bv[None, :, None]      # (B, C, N)
    energy = jnp.einsum("bci,bcj->bij", q, k)                      # (B, N, N)
    attention = jax.nn.softmax(energy, axis=-1)
    out = jnp.einsum("bcj,bij->bci", v, attention)                 # (B, C, N)
    return gamma.reshape(()) * out + x


if __name__ == "__main__":
    B, C = 2, 32
    Cq = C // 8

    key = jax.random.PRNGKey(0)
    kx, kwq, kbq, kwk, kbk, kwv, kbv = jax.random.split(key, 7)

    scale = 1.0 / (C ** 0.5)
    wq = jax.random.normal(kwq, (Cq, C), dtype=jnp.float32) * scale
    bq = jax.random.normal(kbq, (Cq,), dtype=jnp.float32) * scale
    wk = jax.random.normal(kwk, (Cq, C), dtype=jnp.float32) * scale
    bk = jax.random.normal(kbk, (Cq,), dtype=jnp.float32) * scale
    wv = jax.random.normal(kwv, (C, C), dtype=jnp.float32) * scale
    bv = jax.random.normal(kbv, (C,), dtype=jnp.float32) * scale
    gamma0 = jnp.zeros((1,), dtype=jnp.float32)   # matches nn.Parameter(torch.zeros(1))
    gamma1 = jnp.ones((1,), dtype=jnp.float32)

    # --- small single-tile case, exact path (f32 MXU, exact reciprocal) --------
    N = 16
    x = jax.random.normal(kx, (B, C, N), dtype=jnp.float32)

    out0 = self_attention(x, wq, bq, wk, bk, wv, bv, gamma0, mxu_dtype=jnp.float32)
    jax.block_until_ready(out0)
    ref0 = self_attention_ref(x, wq, bq, wk, bk, wv, bv, gamma0)
    assert jnp.allclose(out0, ref0, atol=1e-5, rtol=1e-5), "gamma=0 mismatch"

    out1 = self_attention(x, wq, bq, wk, bk, wv, bv, gamma1, mxu_dtype=jnp.float32)
    jax.block_until_ready(out1)
    ref1 = self_attention_ref(x, wq, bq, wk, bk, wv, bv, gamma1)
    assert jnp.allclose(out1, ref1, atol=1e-4, rtol=1e-4), "gamma=1 mismatch"

    # --- padded + multi-tile case (N=200 -> pad to 256; masked tail keys) ------
    N2 = 200
    x2 = jax.random.normal(jax.random.PRNGKey(1), (B, C, N2), dtype=jnp.float32)
    out2 = self_attention(x2, wq, bq, wk, bk, wv, bv, gamma1,
                          mxu_dtype=jnp.float32, tq_cap=128, tk_cap=128)
    jax.block_until_ready(out2)
    ref2 = self_attention_ref(x2, wq, bq, wk, bk, wv, bv, gamma1)
    assert out2.shape == x2.shape
    assert jnp.allclose(out2, ref2, atol=1e-4, rtol=1e-4), "padded/masked mismatch"

    # --- default bf16 fast path with several online-softmax rescale steps ------
    N3 = 384
    x3 = jax.random.normal(jax.random.PRNGKey(2), (B, C, N3), dtype=jnp.float32)
    out3 = self_attention(x3, wq, bq, wk, bk, wv, bv, gamma1, tk_cap=128)
    jax.block_until_ready(out3)
    ref3 = self_attention_ref(x3, wq, bq, wk, bk, wv, bv, gamma1)
    rel_err = jnp.max(jnp.abs(out3 - ref3)) / (jnp.max(jnp.abs(ref3)) + 1e-6)
    assert rel_err < 0.1, f"bf16 path relative error too large: {rel_err}"

    print("KERNEL_OK")
</pallas_src>

<mosaic_0001>
module attributes {stable_mosaic.version = 11 : i64} {
  func.func @_qkv_projection_kernel(%arg0: i32, %arg1: i32, %arg2: memref<1x32x16xf32, #tpu.memory_space<vmem>>, %arg3: memref<4x32xf32, #tpu.memory_space<vmem>>, %arg4: memref<4x1xf32, #tpu.memory_space<vmem>>, %arg5: memref<4x32xf32, #tpu.memory_space<vmem>>, %arg6: memref<4x1xf32, #tpu.memory_space<vmem>>, %arg7: memref<32x32xf32, #tpu.memory_space<vmem>>, %arg8: memref<32x1xf32, #tpu.memory_space<vmem>>, %arg9: memref<1x4x16xf32, #tpu.memory_space<vmem>>, %arg10: memref<1x4x16xf32, #tpu.memory_space<vmem>>, %arg11: memref<1x32x16xf32, #tpu.memory_space<vmem>>) attributes {dimension_semantics = [#tpu.dimension_semantics<parallel>, #tpu.dimension_semantics<parallel>], iteration_bounds = array<i64: 2, 1>, scalar_prefetch = 0 : i64, scratch_operands = 0 : i64, tpu.core_type = #tpu.core_type<tc>, window_params = [{transform_indices = @transform_0, window_bounds = array<i64: 1, 32, 16>}, {pipeline_mode = #tpu.pipeline_mode<synchronous>, transform_indices = @transform_1, window_bounds = array<i64: 4, 32>}, {pipeline_mode = #tpu.pipeline_mode<synchronous>, transform_indices = @transform_2, window_bounds = array<i64: 4, 1>}, {pipeline_mode = #tpu.pipeline_mode<synchronous>, transform_indices = @transform_3, window_bounds = array<i64: 4, 32>}, {pipeline_mode = #tpu.pipeline_mode<synchronous>, transform_indices = @transform_4, window_bounds = array<i64: 4, 1>}, {pipeline_mode = #tpu.pipeline_mode<synchronous>, transform_indices = @transform_5, window_bounds = array<i64: 32, 32>}, {pipeline_mode = #tpu.pipeline_mode<synchronous>, transform_indices = @transform_6, window_bounds = array<i64: 32, 1>}, {transform_indices = @transform_7, window_bounds = array<i64: 1, 4, 16>}, {transform_indices = @transform_8, window_bounds = array<i64: 1, 4, 16>}, {transform_indices = @transform_9, window_bounds = array<i64: 1, 32, 16>}]} {
    %c0 = arith.constant 0 : index
    %c0_0 = arith.constant 0 : index
    %c0_1 = arith.constant 0 : index
    %0 = vector.load %arg2[%c0, %c0_0, %c0_1] : memref<1x32x16xf32, #tpu.memory_space<vmem>>, vector<1x32x16xf32>
    %1 = vector.shape_cast %0 : vector<1x32x16xf32> to vector<32x16xf32>
    %c0_2 = arith.constant 0 : index
    %c0_3 = arith.constant 0 : index
    %2 = vector.load %arg3[%c0_2, %c0_3] : memref<4x32xf32, #tpu.memory_space<vmem>>, vector<4x32xf32>
    %cst = arith.constant dense<0.000000e+00> : vector<4x16xf32>
    %3 = tpu.matmul %2, %1, %cst {dimension_numbers = #tpu.dot_dimension_numbers<[1], [0], [0], [1], [0, 0, 1, 1], [], []>} : vector<4x32xf32>, vector<32x16xf32>, vector<4x16xf32> -> vector<4x16xf32>
    %c0_4 = arith.constant 0 : index
    %c0_5 = arith.constant 0 : index
    %4 = vector.load %arg4[%c0_4, %c0_5] : memref<4x1xf32, #tpu.memory_space<vmem>>, vector<4x1xf32>
    %5 = vector.broadcast %4 : vector<4x1xf32> to vector<4x16xf32>
    %6 = arith.addf %3, %5 : vector<4x16xf32>
    %c0_6 = arith.constant 0 : index
    %c0_7 = arith.constant 0 : index
    %7 = vector.load %arg5[%c0_6, %c0_7] : memref<4x32xf32, #tpu.memory_space<vmem>>, vector<4x32xf32>
    %cst_8 = arith.constant dense<0.000000e+00> : vector<4x16xf32>
    %8 = tpu.matmul %7, %1, %cst_8 {dimension_numbers = #tpu.dot_dimension_numbers<[1], [0], [0], [1], [0, 0, 1, 1], [], []>} : vector<4x32xf32>, vector<32x16xf32>, vector<4x16xf32> -> vector<4x16xf32>
    %c0_9 = arith.constant 0 : index
    %c0_10 = arith.constant 0 : index
    %9 = vector.load %arg6[%c0_9, %c0_10] : memref<4x1xf32, #tpu.memory_space<vmem>>, vector<4x1xf32>
    %10 = vector.broadcast %9 : vector<4x1xf32> to vector<4x16xf32>
    %11 = arith.addf %8, %10 : vector<4x16xf32>
    %c0_11 = arith.constant 0 : index
    %c0_12 = arith.constant 0 : index
    %12 = vector.load %arg7[%c0_11, %c0_12] : memref<32x32xf32, #tpu.memory_space<vmem>>, vector<32x32xf32>
    %cst_13 = arith.constant dense<0.000000e+00> : vector<32x16xf32>
    %13 = tpu.matmul %12, %1, %cst_13 {dimension_numbers = #tpu.dot_dimension_numbers<[1], [0], [0], [1], [0, 0, 1, 1], [], []>} : vector<32x32xf32>, vector<32x16xf32>, vector<32x16xf32> -> vector<32x16xf32>
    %c0_14 = arith.constant 0 : index
    %c0_15 = arith.constant 0 : index
    %14 = vector.load %arg8[%c0_14, %c0_15] : memref<32x1xf32, #tpu.memory_space<vmem>>, vector<32x1xf32>
    %15 = vector.broadcast %14 : vector<32x1xf32> to vector<32x16xf32>
    %16 = arith.addf %13, %15 : vector<32x16xf32>
    %c0_16 = arith.constant 0 : index
    %c0_17 = arith.constant 0 : index
    %c0_18 = arith.constant 0 : index
    %17 = vector.load %arg9[%c0_16, %c0_17, %c0_18] : memref<1x4x16xf32, #tpu.memory_space<vmem>>, vector<1x4x16xf32>
    %18 = vector.shape_cast %17 : vector<1x4x16xf32> to vector<4x16xf32>
    %19 = vector.shape_cast %6 : vector<4x16xf32> to vector<1x4x16xf32>
    tpu.vector_store %arg9[%c0_16, %c0_17, %c0_18], %19 {strides = array<i32>} : memref<1x4x16xf32, #tpu.memory_space<vmem>>, vector<1x4x16xf32>,
    %c0_19 = arith.constant 0 : index
    %c0_20 = arith.constant 0 : index
    %c0_21 = arith.constant 0 : index
    %20 = vector.load %arg10[%c0_19, %c0_20, %c0_21] : memref<1x4x16xf32, #tpu.memory_space<vmem>>, vector<1x4x16xf32>
    %21 = vector.shape_cast %20 : vector<1x4x16xf32> to vector<4x16xf32>
    %22 = vector.shape_cast %11 : vector<4x16xf32> to vector<1x4x16xf32>
    tpu.vector_store %arg10[%c0_19, %c0_20, %c0_21], %22 {strides = array<i32>} : memref<1x4x16xf32, #tpu.memory_space<vmem>>, vector<1x4x16xf32>,
    %c0_22 = arith.constant 0 : index
    %c0_23 = arith.constant 0 : index
    %c0_24 = arith.constant 0 : index
    %23 = vector.load %arg11[%c0_22, %c0_23, %c0_24] : memref<1x32x16xf32, #tpu.memory_space<vmem>>, vector<1x32x16xf32>
    %24 = vector.shape_cast %23 : vector<1x32x16xf32> to vector<32x16xf32>
    %25 = vector.shape_cast %16 : vector<32x16xf32> to vector<1x32x16xf32>
    tpu.vector_store %arg11[%c0_22, %c0_23, %c0_24], %25 {strides = array<i32>} : memref<1x32x16xf32, #tpu.memory_space<vmem>>, vector<1x32x16xf32>,
    return
  }
  func.func @transform_0(%arg0: i32, %arg1: i32) -> (i32, i32, i32) {
    %c0_i32 = arith.constant 0 : i32
    %c0_i32_0 = arith.constant 0 : i32
    return %arg0, %c0_i32, %arg1 : i32, i32, i32
  }
  func.func @transform_1(%arg0: i32, %arg1: i32) -> (i32, i32) {
    %c0_i32 = arith.constant 0 : i32
    %c0_i32_0 = arith.constant 0 : i32
    %c0_i32_1 = arith.constant 0 : i32
    return %c0_i32, %c0_i32_0 : i32, i32
  }
  func.func @transform_2(%arg0: i32, %arg1: i32) -> (i32, i32) {
    %c0_i32 = arith.constant 0 : i32
    %c0_i32_0 = arith.constant 0 : i32
    %c0_i32_1 = arith.constant 0 : i32
    return %c0_i32, %c0_i32_0 : i32, i32
  }
  func.func @transform_3(%arg0: i32, %arg1: i32) -> (i32, i32) {
    %c0_i32 = arith.constant 0 : i32
    %c0_i32_0 = arith.constant 0 : i32
    %c0_i32_1 = arith.constant 0 : i32
    return %c0_i32, %c0_i32_0 : i32, i32
  }
  func.func @transform_4(%arg0: i32, %arg1: i32) -> (i32, i32) {
    %c0_i32 = arith.constant 0 : i32
    %c0_i32_0 = arith.constant 0 : i32
    %c0_i32_1 = arith.constant 0 : i32
    return %c0_i32, %c0_i32_0 : i32, i32
  }
  func.func @transform_5(%arg0: i32, %arg1: i32) -> (i32, i32) {
    %c0_i32 = arith.constant 0 : i32
    %c0_i32_0 = arith.constant 0 : i32
    %c0_i32_1 = arith.constant 0 : i32
    return %c0_i32, %c0_i32_0 : i32, i32
  }
  func.func @transform_6(%arg0: i32, %arg1: i32) -> (i32, i32) {
    %c0_i32 = arith.constant 0 : i32
    %c0_i32_0 = arith.constant 0 : i32
    %c0_i32_1 = arith.constant 0 : i32
    return %c0_i32, %c0_i32_0 : i32, i32
  }
  func.func @transform_7(%arg0: i32, %arg1: i32) -> (i32, i32, i32) {
    %c0_i32 = arith.constant 0 : i32
    %c0_i32_0 = arith.constant 0 : i32
    return %arg0, %c0_i32, %arg1 : i32, i32, i32
  }
  func.func @transform_8(%arg0: i32, %arg1: i32) -> (i32, i32, i32) {
    %c0_i32 = arith.constant 0 : i32
    %c0_i32_0 = arith.constant 0 : i32
    return %arg0, %c0_i32, %arg1 : i32, i32, i32
  }
  func.func @transform_9(%arg0: i32, %arg1: i32) -> (i32, i32, i32) {
    %c0_i32 = arith.constant 0 : i32
    %c0_i32_0 = arith.constant 0 : i32
    return %arg0, %c0_i32, %arg1 : i32, i32, i32
  }
}

</mosaic_0001>

<llo_original>
// kernel: tpu_custom_call.1
$region0: #{tpu_custom_call.1}
  #allocation0 [shape = 'u32[]', space=smem, size = 0x4, offset = 0x4, fixed_abs, tag = 'smem constant byte address 0x4 - core index']
  #allocation1 [shape = 'u32[144,128]{1,0:T(1,128)}', space=vmem, size = 0x12000, scoped, tag = 'internal scratch']
  %s0 = inlined_call_operand.vmem [shape: f32[2,32,16], index: 0, kind: input, shape index: {}]
  %s1 = inlined_call_operand.vmem [shape: f32[4,32], index: 1, kind: input, shape index: {}]
  %s2 = inlined_call_operand.vmem [shape: f32[4,1], index: 2, kind: input, shape index: {}]
  %s3 = inlined_call_operand.vmem [shape: f32[4,32], index: 3, kind: input, shape index: {}]
  %s4 = inlined_call_operand.vmem [shape: f32[4,1], index: 4, kind: input, shape index: {}]
  %s5 = inlined_call_operand.vmem [shape: f32[32,32], index: 5, kind: input, shape index: {}]
  %s6 = inlined_call_operand.vmem [shape: f32[32,1], index: 6, kind: input, shape index: {}]
  %s7 = inlined_call_operand.hbm [shape: f32[2,4,16], index: 7, kind: output, shape index: {0}]
  %s8 = inlined_call_operand.hbm [shape: f32[2,4,16], index: 8, kind: output, shape index: {1}]
  %s9 = inlined_call_operand.vmem [shape: f32[2,32,16], index: 9, kind: output, shape index: {2}]
  %10 = xla_tuple %s7, %s8, %s9
  %s11 = sld [smem:[#allocation0]]
  $region77: #{tpu_custom_call.1} parent=0
    _
  %s13 = ssub.s32 1, %s11
  %s14 = scalar_select 0, %s13, %s11
  $region1: #{tpu_custom_call.1} parent=0
    #allocation2 [shape = 'u8[4096]{0}', space=vmem, size = 0x1000, scoped, tag = 'output window, operand 0']
    #allocation3 [shape = 's32[2]{0}', space=sflag, size = 0x8, scoped, tag = 'scoped memory for tpu_custom_call.1']
    #allocation4 [shape = 'u8[4096]{0}', space=vmem, size = 0x1000, scoped, tag = 'output window, operand 1']
    #allocation5 [shape = 's32[2]{0}', space=sflag, size = 0x8, scoped, tag = 'scoped memory for tpu_custom_call.1']
    %15 = vsyncpa [#allocation3], 0
    %s16 = scalar_lea.sflag [#allocation3], 1
    %17 = vsyncpa %s16, 0
    %18 = vsyncpa [#allocation5], 0
    %s19 = scalar_lea.sflag [#allocation5], 1
    %20 = vsyncpa %s19, 0
    loop: start=0, step=1, limit=4
    $region2: #{tpu_custom_call.1} parent=1 // loop_pre_header
      _
    $region3: #{tpu_custom_call.1} parent=1 // loop_header
      %s22 = sphi 0, %s26
      %p23 = scmp.ge.s32.totalorder %s22, 4
      %s29 = sphi 0, %s41
      %s30 = sphi 0, %s37
      %s31 = sphi 0, %s29
      %s32 = sphi 0, %s30
      %s33 = sphi 0, %s31
      %s34 = sphi 0, %s32
      %s46 = sphi 0, %s48
      %s49 = sphi 0, %s46
      %s50 = sphi 0, %s49
      %s66 = sphi 0, %s50
      %s70 = sphi 0, %s70
      %s72 = sphi 0, %s70
      %s73 = sphi 0, %s72
      %s87 = sphi 0, %s73
      %s91 = sphi 0, %s91
      %s93 = sphi 0, %s91
      %s94 = sphi 0, %s93
      %s108 = sphi 0, %s94
      %s112 = sphi 0, %s112
      %s114 = sphi 0, %s112
      %s115 = sphi 0, %s114
      %s129 = sphi 0, %s115
      %s133 = sphi 0, %s133
      %s135 = sphi 0, %s133
      %s136 = sphi 0, %s135
      %s150 = sphi 0, %s136
      %s154 = sphi 0, %s154
      %s156 = sphi 0, %s154
      %s157 = sphi 0, %s156
      %s171 = sphi 0, %s157
      %s175 = sphi 0, %s175
      %s177 = sphi 0, %s175
      %s178 = sphi 0, %s177
      %s192 = sphi 0, %s178
      %s200 = sphi 0, %s202
      %s203 = sphi 0, %s200
      %s204 = sphi 0, %s203
      %s220 = sphi 0, %s204
      %s228 = sphi 0, %s230
      %s231 = sphi 0, %s228
      %s232 = sphi 0, %s231
      %s248 = sphi 0, %s232
      %s256 = sphi 0, %s258
      %s259 = sphi 0, %s256
      %s260 = sphi 0, %s259
      %s276 = sphi 0, %s260
    $region4: #{tpu_custom_call.1} parent=1 // loop_header_branch
      %25 = sbr.rel (%p23) target = $region8
    $region5: #{tpu_custom_call.1} parent=1 // loop_body
      %s27 = ssub.s32 %s22, 1
      %s28 = ssub.s32 %s22, 2
      %s35 = sadd.s32 1, %s30
      %p36 = scmp.ge.s32.totalorder %s35, 1
      %s37 = scalar_select %p36, 0, %s35
      %s38 = sadd.s32 1, %s29
      %s39 = scalar_select %p36, %s38, %s29
      %p40 = scmp.ge.s32.totalorder %s39, 2
      %s41 = scalar_select %p40, 0, %s39
      %s42 = ssub.s32 %s29, %s41
      %s43 = ssub.s32 %s30, %s37
      %s44 = sor.u32 %s42, %s43
      %p45 = scmp.eq.s32.totalorder %s44, 0
      %s47 = sadd.s32 %s46, 1
      %s48 = scalar_select %p45, %s46, %s47
      %p51 = pneg %p45
      %p52 = scmp.eq.s32.totalorder %s22, 1
      %p53 = por %p51, %p52
      %p54 = scmp.ne.s32.totalorder %s46, %s49
      %p55 = scmp.eq.s32.totalorder %s22, 0
      %p56 = por %p54, %p55
      %p57 = scmp.ne.s32.totalorder %s46, %s49
      %p58 = scmp.eq.s32.totalorder %s27, 1
      %p59 = por %p57, %p58
      %p60 = scmp.ne.s32.totalorder %s49, %s50
      %p61 = scmp.eq.s32.totalorder %s27, 0
      %p62 = por %p60, %p61
      %p63 = scmp.ne.s32.totalorder %s49, %s50
      %p64 = scmp.eq.s32.totalorder %s28, 1
      %p65 = por %p63, %p64
      %p67 = scmp.ne.s32.totalorder %s50, %s66
      %p68 = scmp.eq.s32.totalorder %s28, 0
      %p69 = por %p67, %p68
      %s71 = sadd.s32 %s70, 1
      %p74 = scmp.eq.s32.totalorder %s22, 1
      %p75 = scmp.ne.s32.totalorder %s70, %s72
      %p76 = scmp.eq.s32.totalorder %s22, 0
      %p77 = por %p75, %p76
      %p78 = scmp.ne.s32.totalorder %s70, %s72
      %p79 = scmp.eq.s32.totalorder %s27, 1
      %p80 = por %p78, %p79
      %p81 = scmp.ne.s32.totalorder %s72, %s73
      %p82 = scmp.eq.s32.totalorder %s27, 0
      %p83 = por %p81, %p82
      %p84 = scmp.ne.s32.totalorder %s72, %s73
      %p85 = scmp.eq.s32.totalorder %s28, 1
      %p86 = por %p84, %p85
      %p88 = scmp.ne.s32.totalorder %s73, %s87
      %p89 = scmp.eq.s32.totalorder %s28, 0
      %p90 = por %p88, %p89
      %s92 = sadd.s32 %s91, 1
      %p95 = scmp.eq.s32.totalorder %s22, 1
      %p96 = scmp.ne.s32.totalorder %s91, %s93
      %p97 = scmp.eq.s32.totalorder %s22, 0
      %p98 = por %p96, %p97
      %p99 = scmp.ne.s32.totalorder %s91, %s93
      %p100 = scmp.eq.s32.totalorder %s27, 1
      %p101 = por %p99, %p100
      %p102 = scmp.ne.s32.totalorder %s93, %s94
      %p103 = scmp.eq.s32.totalorder %s27, 0
      %p104 = por %p102, %p103
      %p105 = scmp.ne.s32.totalorder %s93, %s94
      %p106 = scmp.eq.s32.totalorder %s28, 1
      %p107 = por %p105, %p106
      %p109 = scmp.ne.s32.totalorder %s94, %s108
      %p110 = scmp.eq.s32.totalorder %s28, 0
      %p111 = por %p109, %p110
      %s113 = sadd.s32 %s112, 1
      %p116 = scmp.eq.s32.totalorder %s22, 1
      %p117 = scmp.ne.s32.totalorder %s112, %s114
      %p118 = scmp.eq.s32.totalorder %s22, 0
      %p119 = por %p117, %p118
      %p120 = scmp.ne.s32.totalorder %s112, %s114
      %p121 = scmp.eq.s32.totalorder %s27, 1
      %p122 = por %p120, %p121
      %p123 = scmp.ne.s32.totalorder %s114, %s115
      %p124 = scmp.eq.s32.totalorder %s27, 0
      %p125 = por %p123, %p124
      %p126 = scmp.ne.s32.totalorder %s114, %s115
      %p127 = scmp.eq.s32.totalorder %s28, 1
      %p128 = por %p126, %p127
      %p130 = scmp.ne.s32.totalorder %s115, %s129
      %p131 = scmp.eq.s32.totalorder %s28, 0
      %p132 = por %p130, %p131
      %s134 = sadd.s32 %s133, 1
      %p137 = scmp.eq.s32.totalorder %s22, 1
      %p138 = scmp.ne.s32.totalorder %s133, %s135
      %p139 = scmp.eq.s32.totalorder %s22, 0
      %p140 = por %p138, %p139
      %p141 = scmp.ne.s32.totalorder %s133, %s135
      %p142 = scmp.eq.s32.totalorder %s27, 1
      %p143 = por %p141, %p142
      %p144 = scmp.ne.s32.totalorder %s135, %s136
      %p145 = scmp.eq.s32.totalorder %s27, 0
      %p146 = por %p144, %p145
      %p147 = scmp.ne.s32.totalorder %s135, %s136
      %p148 = scmp.eq.s32.totalorder %s28, 1
      %p149 = por %p147, %p148
      %p151 = scmp.ne.s32.totalorder %s136, %s150
      %p152 = scmp.eq.s32.totalorder %s28, 0
      %p153 = por %p151, %p152
      %s155 = sadd.s32 %s154, 1
      %p158 = scmp.eq.s32.totalorder %s22, 1
      %p159 = scmp.ne.s32.totalorder %s154, %s156
      %p160 = scmp.eq.s32.totalorder %s22, 0
      %p161 = por %p159, %p160
      %p162 = scmp.ne.s32.totalorder %s154, %s156
      %p163 = scmp.eq.s32.totalorder %s27, 1
      %p164 = por %p162, %p163
      %p165 = scmp.ne.s32.totalorder %s156, %s157
      %p166 = scmp.eq.s32.totalorder %s27, 0
      %p167 = por %p165, %p166
      %p168 = scmp.ne.s32.totalorder %s156, %s157
      %p169 = scmp.eq.s32.totalorder %s28, 1
      %p170 = por %p168, %p169
      %p172 = scmp.ne.s32.totalorder %s157, %s171
      %p173 = scmp.eq.s32.totalorder %s28, 0
      %p174 = por %p172, %p173
      %s176 = sadd.s32 %s175, 1
      %p179 = scmp.eq.s32.totalorder %s22, 1
      %p180 = scmp.ne.s32.totalorder %s175, %s177
      %p181 = scmp.eq.s32.totalorder %s22, 0
      %p182 = por %p180, %p181
      %p183 = scmp.ne.s32.totalorder %s175, %s177
      %p184 = scmp.eq.s32.totalorder %s27, 1
      %p185 = por %p183, %p184
      %p186 = scmp.ne.s32.totalorder %s177, %s178
      %p187 = scmp.eq.s32.totalorder %s27, 0
      %p188 = por %p186, %p187
      %p189 = scmp.ne.s32.totalorder %s177, %s178
      %p190 = scmp.eq.s32.totalorder %s28, 1
      %p191 = por %p189, %p190
      %p193 = scmp.ne.s32.totalorder %s178, %s192
      %p194 = scmp.eq.s32.totalorder %s28, 0
      %p195 = por %p193, %p194
      %s196 = ssub.s32 %s29, %s41
      %s197 = ssub.s32 %s30, %s37
      %s198 = sor.u32 %s196, %s197
      %p199 = scmp.eq.s32.totalorder %s198, 0
      %s201 = sadd.s32 %s200, 1
      %s202 = scalar_select %p199, %s200, %s201
      %p205 = pneg %p199
      %p206 = scmp.eq.s32.totalorder %s22, 1
      %p207 = por %p205, %p206
      %p208 = scmp.ne.s32.totalorder %s200, %s203
      %p209 = scmp.eq.s32.totalorder %s22, 0
      %p210 = por %p208, %p209
      %p211 = scmp.ne.s32.totalorder %s200, %s203
      %p212 = scmp.eq.s32.totalorder %s27, 1
      %p213 = por %p211, %p212
      %p214 = scmp.ne.s32.totalorder %s203, %s204
      %p215 = scmp.eq.s32.totalorder %s27, 0
      %p216 = por %p214, %p215
      %p217 = scmp.ne.s32.totalorder %s203, %s204
      %p218 = scmp.eq.s32.totalorder %s28, 1
      %p219 = por %p217, %p218
      %p221 = scmp.ne.s32.totalorder %s204, %s220
      %p222 = scmp.eq.s32.totalorder %s28, 0
      %p223 = por %p221, %p222
      %s224 = ssub.s32 %s29, %s41
      %s225 = ssub.s32 %s30, %s37
      %s226 = sor.u32 %s224, %s225
      %p227 = scmp.eq.s32.totalorder %s226, 0
      %s229 = sadd.s32 %s228, 1
      %s230 = scalar_select %p227, %s228, %s229
      %p233 = pneg %p227
      %p234 = scmp.eq.s32.totalorder %s22, 1
      %p235 = por %p233, %p234
      %p236 = scmp.ne.s32.totalorder %s228, %s231
      %p237 = scmp.eq.s32.totalorder %s22, 0
      %p238 = por %p236, %p237
      %p239 = scmp.ne.s32.totalorder %s228, %s231
      %p240 = scmp.eq.s32.totalorder %s27, 1
      %p241 = por %p239, %p240
      %p242 = scmp.ne.s32.totalorder %s231, %s232
      %p243 = scmp.eq.s32.totalorder %s27, 0
      %p244 = por %p242, %p243
      %p245 = scmp.ne.s32.totalorder %s231, %s232
      %p246 = scmp.eq.s32.totalorder %s28, 1
      %p247 = por %p245, %p246
      %p249 = scmp.ne.s32.totalorder %s232, %s248
      %p250 = scmp.eq.s32.totalorder %s28, 0
      %p251 = por %p249, %p250
      %s252 = ssub.s32 %s29, %s41
      %s253 = ssub.s32 %s30, %s37
      %s254 = sor.u32 %s252, %s253
      %p255 = scmp.eq.s32.totalorder %s254, 0
      %s257 = sadd.s32 %s256, 1
      %s258 = scalar_select %p255, %s256, %s257
      %p261 = pneg %p255
      %p262 = scmp.eq.s32.totalorder %s22, 1
      %p263 = por %p261, %p262
      %p264 = scmp.ne.s32.totalorder %s256, %s259
      %p265 = scmp.eq.s32.totalorder %s22, 0
      %p266 = por %p264, %p265
      %p267 = scmp.ne.s32.totalorder %s256, %s259
      %p268 = scmp.eq.s32.totalorder %s27, 1
      %p269 = por %p267, %p268
      %p270 = scmp.ne.s32.totalorder %s259, %s260
      %p271 = scmp.eq.s32.totalorder %s27, 0
      %p272 = por %p270, %p271
      %p273 = scmp.ne.s32.totalorder %s259, %s260
      %p274 = scmp.eq.s32.totalorder %s28, 1
      %p275 = por %p273, %p274
      %p277 = scmp.ne.s32.totalorder %s260, %s276
      %p278 = scmp.eq.s32.totalorder %s28, 0
      %p279 = por %p277, %p278
      %p280 = scmp.le.s32.totalorder 1, %s22
      %p281 = scmp.lt.s32.totalorder %s22, 3
      %p282 = pnand %p280, %p281
      %p283 = pneg %p282
      // Predicated region
      $region9: #{tpu_custom_call.1} parent=5 // pred_check
        _
      $region10: #{tpu_custom_call.1} parent=5 // pred_check_branch
        %285 = sbr.rel (%p282) target = $region12
      $region11: #{tpu_custom_call.1} parent=5 // pred_region
        %s286 = ssub.s32 %s22, 1
        // Predicated region
        $region13: #{tpu_custom_call.1} parent=11 // pred_check
          %p287 = pneg %p83
        $region14: #{tpu_custom_call.1} parent=11 // pred_check_branch
          %289 = sbr.rel (%p287) target = $region16
        $region15: #{tpu_custom_call.1} parent=11 // pred_region
          _
        $region16: #{tpu_custom_call.1} parent=11 // pred_fallthru
          _
        // Predicated region
        $region17: #{tpu_custom_call.1} parent=11 // pred_check
          %p290 = pneg %p104
        $region18: #{tpu_custom_call.1} parent=11 // pred_check_branch
          %292 = sbr.rel (%p290) target = $region20
        $region19: #{tpu_custom_call.1} parent=11 // pred_region
          _
        $region20: #{tpu_custom_call.1} parent=11 // pred_fallthru
          _
        // Predicated region
        $region21: #{tpu_custom_call.1} parent=11 // pred_check
          %p293 = pneg %p125
        $region22: #{tpu_custom_call.1} parent=11 // pred_check_branch
          %295 = sbr.rel (%p293) target = $region24
        $region23: #{tpu_custom_call.1} parent=11 // pred_region
          _
        $region24: #{tpu_custom_call.1} parent=11 // pred_fallthru
          _
        // Predicated region
        $region25: #{tpu_custom_call.1} parent=11 // pred_check
          %p296 = pneg %p146
        $region26: #{tpu_custom_call.1} parent=11 // pred_check_branch
          %298 = sbr.rel (%p296) target = $region28
        $region27: #{tpu_custom_call.1} parent=11 // pred_region
          _
        $region28: #{tpu_custom_call.1} parent=11 // pred_fallthru
          _
        // Predicated region
        $region29: #{tpu_custom_call.1} parent=11 // pred_check
          %p299 = pneg %p167
        $region30: #{tpu_custom_call.1} parent=11 // pred_check_branch
          %301 = sbr.rel (%p299) target = $region32
        $region31: #{tpu_custom_call.1} parent=11 // pred_region
          _
        $region32: #{tpu_custom_call.1} parent=11 // pred_fallthru
          _
        // Predicated region
        $region33: #{tpu_custom_call.1} parent=11 // pred_check
          %p302 = pneg %p188
        $region34: #{tpu_custom_call.1} parent=11 // pred_check_branch
          %304 = sbr.rel (%p302) target = $region36
        $region35: #{tpu_custom_call.1} parent=11 // pred_region
          _
        $region36: #{tpu_custom_call.1} parent=11 // pred_fallthru
          _
      $region12: #{tpu_custom_call.1} parent=5 // pred_fallthru
        _
      %p305 = scmp.lt.s32.totalorder %s22, 2
      // Predicated region
      $region37: #{tpu_custom_call.1} parent=5 // pred_check
        %p306 = pneg %p305
      $region38: #{tpu_custom_call.1} parent=5 // pred_check_branch
        %308 = sbr.rel (%p306) target = $region40
      $region39: #{tpu_custom_call.1} parent=5 // pred_region
        // Predicated region
        $region41: #{tpu_custom_call.1} parent=39 // pred_check
          %p309 = pneg %p56
        $region42: #{tpu_custom_call.1} parent=39 // pred_check_branch
          %311 = sbr.rel (%p309) target = $region44
        $region43: #{tpu_custom_call.1} parent=39 // pred_region
          %p312 = scmp.lt.s32.totalorder %s29, 1
          %s313 = scalar_select %p312, %s29, 1
          %p314 = scmp.lt.s32.totalorder %s30, 0
          %s315 = scalar_select %p314, %s30, 0
          %s316 = smul.addr %s313, 4
          %s317 = sadd.s32 %s315, %s316
          %s318 = smul.addr %s317, 8
          %s319 = scalar_lea.vmem %s0, %s318
        $region44: #{tpu_custom_call.1} parent=39 // pred_fallthru
          _
      $region40: #{tpu_custom_call.1} parent=5 // pred_fallthru
        _
      %p320 = scmp.le.s32.totalorder 1, %s22
      %p321 = scmp.lt.s32.totalorder %s22, 3
      %p322 = pnand %p320, %p321
      %p323 = pneg %p322
      // Predicated region
      $region45: #{tpu_custom_call.1} parent=5 // pred_check
        _
      $region46: #{tpu_custom_call.1} parent=5 // pred_check_branch
        %325 = sbr.rel (%p322) target = $region48
      $region47: #{tpu_custom_call.1} parent=5 // pred_region
        %s326 = ssub.s32 %s22, 1
        %p327 = scmp.lt.s32.totalorder %s31, 1
        %s328 = scalar_select %p327, %s31, 1
        %p329 = scmp.lt.s32.totalorder %s32, 0
        %s330 = scalar_select %p329, %s32, 0
        %s331 = smul.addr %s328, 4
        %s332 = sadd.s32 %s330, %s331
        %s333 = smul.addr %s332, 8
        %s334 = scalar_lea.vmem %s0, %s333
        %p335 = pneg %p62
        %p336 = pneg %p59
        %p337 = pneg %p83
        %p338 = pneg %p80
        %p339 = pneg %p104
        %p340 = pneg %p101
        %p341 = pneg %p125
        %p342 = pneg %p122
        %p343 = pneg %p146
        %p344 = pneg %p143
        %p345 = pneg %p167
        %p346 = pneg %p164
        %p347 = pneg %p188
        %p348 = pneg %p185
        %p349 = pneg %p216
        %p350 = pneg %p213
        %s351 = sand.u32 %s203, 1
        %s352 = scalar_lea.sflag [#allocation3], %s351
        %s353 = sand.u32 %s203, 1
        %s354 = smul.addr %s353, 4
        %s355 = scalar_lea.vmem [#allocation2], %s354
        %p356 = pneg %p244
        %p357 = pneg %p241
        %s358 = sand.u32 %s231, 1
        %s359 = scalar_lea.sflag [#allocation5], %s358
        %s360 = sand.u32 %s231, 1
        %s361 = smul.addr %s360, 4
        %s362 = scalar_lea.vmem [#allocation4], %s361
        %p363 = pneg %p272
        %p364 = pneg %p269
        %p365 = scmp.lt.s32.totalorder %s31, 1
        %s366 = scalar_select %p365, %s31, 1
        %p367 = scmp.lt.s32.totalorder %s32, 0
        %s368 = scalar_select %p367, %s32, 0
        %s369 = smul.addr %s366, 4
        %s370 = sadd.s32 %s368, %s369
        %s371 = smul.addr %s370, 8
        %s372 = scalar_lea.vmem %s9, %s371
        %p373 = scmp.lt.s32.totalorder %s31, 1
        %s374 = scalar_select %p373, %s31, 1
        %p375 = scmp.lt.s32.totalorder %s32, 0
        %s376 = scalar_select %p375, %s32, 0
        %s377 = smul.addr %s374, 4
        %s378 = sadd.s32 %s376, %s377
        %s379 = smul.addr %s378, 8
        %s380 = scalar_lea.vmem %s0, %s379
        %p381 = scmp.lt.s32.totalorder %s31, 1
        %s382 = scalar_select %p381, %s31, 1
        %p383 = scmp.lt.s32.totalorder %s32, 0
        %s384 = scalar_select %p383, %s32, 0
        %s385 = smul.addr %s382, 4
        %s386 = sadd.s32 %s384, %s385
        %s387 = smul.addr %s386, 8
        %s388 = scalar_lea.vmem %s9, %s387
        %v389 = vld [vmem:[%s380] sm:$0xff]
        %v390 = vld [vmem:[%s380 + $0x8] sm:$0xff]
        %v391 = vld [vmem:[%s380 + $0x10] sm:$0xff]
        %v392 = vld [vmem:[%s380 + $0x18] sm:$0xff]
        %v393 = vld [vmem:[%s1] sm:$0xf]
        %v394 = vld [vmem:[%s2] sm:$0xf]
        %396 = vset.pattern.permute.xlu0 0
        %397 = vperm.xlu0 %396, %v394
        %v398 = vpop.permute.xlu0 %397
        %vm400 = vcmask 261120
        %v402 = vsel %vm400, %v393, 0
        %404 = vmatprep.subr.mxu0 0.0
        %405 = vmatpush1.msra.mxu0 %v389
        %406 = vmatprep.subr.mxu0 0.0
        %407 = vmatpush1.msra.mxu0 %v390
        %408 = vmatprep.subr.mxu0 0.0
        %409 = vmatpush1.msra.mxu0 %v391
        %410 = vmatprep.subr.mxu0 0.0
        %411 = vmatpush1.msra.mxu0 %v392
        %412 = vmatprep.subr.mxu0 0.0
        %413 = vmatpush1.msra.mxu0 0.0
        %414 = vmatprep.subr.mxu0 0.0
        %415 = vmatpush1.msra.mxu0 0.0
        %416 = vmatprep.subr.mxu0 0.0
        %417 = vmatpush1.msra.mxu0 0.0
        %418 = vmatprep.subr.mxu0 0.0
        %419 = vmatpush1.msra.mxu0 0.0
        %420 = vmatprep.subr.mxu0 0.0
        %421 = vmatpush1.msra.mxu0 0.0
        %422 = vmatprep.subr.mxu0 0.0
        %423 = vmatpush1.msra.mxu0 0.0
        %424 = vmatprep.subr.mxu0 0.0
        %425 = vmatpush1.msra.mxu0 0.0
        %426 = vmatprep.subr.mxu0 0.0
        %427 = vmatpush1.msra.mxu0 0.0
        %428 = vmatprep.subr.mxu0 0.0
        %429 = vmatpush1.msra.mxu0 0.0
        %430 = vmatprep.subr.mxu0 0.0
        %431 = vmatpush1.msra.mxu0 0.0
        %432 = vmatprep.subr.mxu0 0.0
        %433 = vmatpush1.msra.mxu0 0.0
        %434 = vmatprep.subr.mxu0 0.0
        %435 = vmatpush1.msra.mxu0 0.0
        %436 = vmatprep.subr.mxu0 0.0
        %437 = vmatpush1.msra.mxu0 0.0
        %438 = vmatprep.subr.mxu0 0.0
        %439 = vmatpush1.msra.mxu0 0.0
        %440 = vmatprep.subr.mxu0 0.0
        %441 = vmatpush1.msra.mxu0 0.0
        %442 = vmatprep.subr.mxu0 0.0
        %443 = vmatpush1.msra.mxu0 0.0
        %444 = vmatprep.subr.mxu0 0.0
        %445 = vmatpush1.msra.mxu0 0.0
        %446 = vmatprep.subr.mxu0 0.0
        %447 = vmatpush1.msra.mxu0 0.0
        %448 = vmatprep.subr.mxu0 0.0
        %449 = vmatpush1.msra.mxu0 0.0
        %450 = vmatprep.subr.mxu0 0.0
        %451 = vmatpush1.msra.mxu0 0.0
        %452 = vmatprep.subr.mxu0 0.0
        %453 = vmatpush1.msra.mxu0 0.0
        %454 = vmatprep.subr.mxu0 0.0
        %455 = vmatpush1.msra.mxu0 0.0
        %456 = vmatprep.subr.mxu0 0.0
        %457 = vmatpush1.msra.mxu0 0.0
        %458 = vmatprep.subr.mxu0 0.0
        %459 = vmatpush1.msra.mxu0 0.0
        %460 = vmatprep.subr.mxu0 0.0
        %461 = vmatpush1.msra.mxu0 0.0
        %462 = vmatprep.subr.mxu0 0.0
        %463 = vmatpush1.msra.mxu0 0.0
        %464 = vmatprep.subr.mxu0 0.0
        %465 = vmatpush1.msra.mxu0 0.0
        %466 = vmatprep.subr.mxu0 0.0
        %467 = vmatpush1.msra.mxu0 0.0
        %468 = vmatprep.mubr.f32.mxu0 0.0
        %469 = vmatmul.mubr.f32.gmra.mrb[0].mxu0 %v402
        %v470 = vpop.f32.mrb[0].mxu0
        %v471 = vadd.f32 %v398, %v470
        %v472 = vpop.f32.mrb[0].mxu0
        %473 = vdwg.mxu0
        %v474 = vld [vmem:[%s3] sm:$0xf]
        %v475 = vld [vmem:[%s4] sm:$0xf]
        %477 = vset.pattern.permute.xlu0 0
        %478 = vperm.xlu0 %477, %v475
        %v479 = vpop.permute.xlu0 %478
        %v482 = vsel %vm400, %v474, 0
        %484 = vmatprep.subr.mxu0 0.0
        %485 = vmatpush1.msra.mxu0 %v389
        %486 = vmatprep.subr.mxu0 0.0
        %487 = vmatpush1.msra.mxu0 %v390
        %488 = vmatprep.subr.mxu0 0.0
        %489 = vmatpush1.msra.mxu0 %v391
        %490 = vmatprep.subr.mxu0 0.0
        %491 = vmatpush1.msra.mxu0 %v392
        %492 = vmatprep.subr.mxu0 0.0
        %493 = vmatpush1.msra.mxu0 0.0
        %494 = vmatprep.subr.mxu0 0.0
        %495 = vmatpush1.msra.mxu0 0.0
        %496 = vmatprep.subr.mxu0 0.0
        %497 = vmatpush1.msra.mxu0 0.0
        %498 = vmatprep.subr.mxu0 0.0
        %499 = vmatpush1.msra.mxu0 0.0
        %500 = vmatprep.subr.mxu0 0.0
        %501 = vmatpush1.msra.mxu0 0.0
        %502 = vmatprep.subr.mxu0 0.0
        %503 = vmatpush1.msra.mxu0 0.0
        %504 = vmatprep.subr.mxu0 0.0
        %505 = vmatpush1.msra.mxu0 0.0
        %506 = vmatprep.subr.mxu0 0.0
        %507 = vmatpush1.msra.mxu0 0.0
        %508 = vmatprep.subr.mxu0 0.0
        %509 = vmatpush1.msra.mxu0 0.0
        %510 = vmatprep.subr.mxu0 0.0
        %511 = vmatpush1.msra.mxu0 0.0
        %512 = vmatprep.subr.mxu0 0.0
        %513 = vmatpush1.msra.mxu0 0.0
        %514 = vmatprep.subr.mxu0 0.0
        %515 = vmatpush1.msra.mxu0 0.0
        %516 = vmatprep.subr.mxu0 0.0
        %517 = vmatpush1.msra.mxu0 0.0
        %518 = vmatprep.subr.mxu0 0.0
        %519 = vmatpush1.msra.mxu0 0.0
        %520 = vmatprep.subr.mxu0 0.0
        %521 = vmatpush1.msra.mxu0 0.0
        %522 = vmatprep.subr.mxu0 0.0
        %523 = vmatpush1.msra.mxu0 0.0
        %524 = vmatprep.subr.mxu0 0.0
        %525 = vmatpush1.msra.mxu0 0.0
        %526 = vmatprep.subr.mxu0 0.0
        %527 = vmatpush1.msra.mxu0 0.0
        %528 = vmatprep.subr.mxu0 0.0
        %529 = vmatpush1.msra.mxu0 0.0
        %530 = vmatprep.subr.mxu0 0.0
        %531 = vmatpush1.msra.mxu0 0.0
        %532 = vmatprep.subr.mxu0 0.0
        %533 = vmatpush1.msra.mxu0 0.0
        %534 = vmatprep.subr.mxu0 0.0
        %535 = vmatpush1.msra.mxu0 0.0
        %536 = vmatprep.subr.mxu0 0.0
        %537 = vmatpush1.msra.mxu0 0.0
        %538 = vmatprep.subr.mxu0 0.0
        %539 = vmatpush1.msra.mxu0 0.0
        %540 = vmatprep.subr.mxu0 0.0
        %541 = vmatpush1.msra.mxu0 0.0
        %542 = vmatprep.subr.mxu0 0.0
        %543 = vmatpush1.msra.mxu0 0.0
        %544 = vmatprep.subr.mxu0 0.0
        %545 = vmatpush1.msra.mxu0 0.0
        %546 = vmatprep.subr.mxu0 0.0
        %547 = vmatpush1.msra.mxu0 0.0
        %548 = vmatprep.mubr.f32.mxu0 0.0
        %549 = vmatmul.mubr.f32.gmra.mrb[0].mxu0 %v482
        %v550 = vpop.f32.mrb[0].mxu0
        %v551 = vadd.f32 %v479, %v550
        %v552 = vpop.f32.mrb[0].mxu0
        %553 = vdwg.mxu0
        %v554 = vld [vmem:[%s5] sm:$0xff]
        %v555 = vld [vmem:[%s5 + $0x8] sm:$0xff]
        %v556 = vld [vmem:[%s5 + $0x10] sm:$0xff]
        %v557 = vld [vmem:[%s5 + $0x18] sm:$0xff]
        %v558 = vld [vmem:[%s6] sm:$0xff]
        %v559 = vld [vmem:[%s6 + $0x8] sm:$0xff]
        %v560 = vld [vmem:[%s6 + $0x10] sm:$0xff]
        %v561 = vld [vmem:[%s6 + $0x18] sm:$0xff]
        %563 = vset.pattern.permute.xlu0 0
        %564 = vperm.xlu0 %563, %v558
        %v565 = vpop.permute.xlu0 %564
        %568 = vset.pattern.permute.xlu0 0
        %569 = vperm.xlu0 %568, %v559
        %v570 = vpop.permute.xlu0 %569
        %573 = vset.pattern.permute.xlu0 0
        %574 = vperm.xlu0 %573, %v560
        %v575 = vpop.permute.xlu0 %574
        %578 = vset.pattern.permute.xlu0 0
        %579 = vperm.xlu0 %578, %v561
        %v580 = vpop.permute.xlu0 %579
        %v583 = vsel %vm400, %v554, 0
        %v586 = vsel %vm400, %v555, 0
        %v589 = vsel %vm400, %v556, 0
        %v592 = vsel %vm400, %v557, 0
        %594 = vmatprep.subr.mxu0 0.0
        %595 = vmatpush1.msra.mxu0 %v389
        %596 = vmatprep.subr.mxu0 0.0
        %597 = vmatpush1.msra.mxu0 %v390
        %598 = vmatprep.subr.mxu0 0.0
        %599 = vmatpush1.msra.mxu0 %v391
        %600 = vmatprep.subr.mxu0 0.0
        %601 = vmatpush1.msra.mxu0 %v392
        %602 = vmatprep.subr.mxu0 0.0
        %603 = vmatpush1.msra.mxu0 0.0
        %604 = vmatprep.subr.mxu0 0.0
        %605 = vmatpush1.msra.mxu0 0.0
        %606 = vmatprep.subr.mxu0 0.0
        %607 = vmatpush1.msra.mxu0 0.0
        %608 = vmatprep.subr.mxu0 0.0
        %609 = vmatpush1.msra.mxu0 0.0
        %610 = vmatprep.subr.mxu0 0.0
        %611 = vmatpush1.msra.mxu0 0.0
        %612 = vmatprep.subr.mxu0 0.0
        %613 = vmatpush1.msra.mxu0 0.0
        %614 = vmatprep.subr.mxu0 0.0
        %615 = vmatpush1.msra.mxu0 0.0
        %616 = vmatprep.subr.mxu0 0.0
        %617 = vmatpush1.msra.mxu0 0.0
        %618 = vmatprep.subr.mxu0 0.0
        %619 = vmatpush1.msra.mxu0 0.0
        %620 = vmatprep.subr.mxu0 0.0
        %621 = vmatpush1.msra.mxu0 0.0
        %622 = vmatprep.subr.mxu0 0.0
        %623 = vmatpush1.msra.mxu0 0.0
        %624 = vmatprep.subr.mxu0 0.0
        %625 = vmatpush1.msra.mxu0 0.0
        %626 = vmatprep.subr.mxu0 0.0
        %627 = vmatpush1.msra.mxu0 0.0
        %628 = vmatprep.subr.mxu0 0.0
        %629 = vmatpush1.msra.mxu0 0.0
        %630 = vmatprep.subr.mxu0 0.0
        %631 = vmatpush1.msra.mxu0 0.0
        %632 = vmatprep.subr.mxu0 0.0
        %633 = vmatpush1.msra.mxu0 0.0
        %634 = vmatprep.subr.mxu0 0.0
        %635 = vmatpush1.msra.mxu0 0.0
        %636 = vmatprep.subr.mxu0 0.0
        %637 = vmatpush1.msra.mxu0 0.0
        %638 = vmatprep.subr.mxu0 0.0
        %639 = vmatpush1.msra.mxu0 0.0
        %640 = vmatprep.subr.mxu0 0.0
        %641 = vmatpush1.msra.mxu0 0.0
        %642 = vmatprep.subr.mxu0 0.0
        %643 = vmatpush1.msra.mxu0 0.0
        %644 = vmatprep.subr.mxu0 0.0
        %645 = vmatpush1.msra.mxu0 0.0
        %646 = vmatprep.subr.mxu0 0.0
        %647 = vmatpush1.msra.mxu0 0.0
        %648 = vmatprep.subr.mxu0 0.0
        %649 = vmatpush1.msra.mxu0 0.0
        %650 = vmatprep.subr.mxu0 0.0
        %651 = vmatpush1.msra.mxu0 0.0
        %652 = vmatprep.subr.mxu0 0.0
        %653 = vmatpush1.msra.mxu0 0.0
        %654 = vmatprep.subr.mxu0 0.0
        %655 = vmatpush1.msra.mxu0 0.0
        %656 = vmatprep.subr.mxu0 0.0
        %657 = vmatpush1.msra.mxu0 0.0
        %658 = vmatprep.mubr.f32.mxu0 0.0
        %659 = vmatmul.mubr.f32.gmra.mrb[0].mxu0 %v583
        %v660 = vpop.f32.mrb[0].mxu0
        %v661 = vadd.f32 %v565, %v660
        %v662 = vpop.f32.mrb[0].mxu0
        %663 = vmatprep.mubr.f32.mxu0 0.0
        %664 = vmatmul.mubr.f32.gmra.mrb[0].mxu0 %v586
        %v665 = vpop.f32.mrb[0].mxu0
        %v666 = vadd.f32 %v570, %v665
        %v667 = vpop.f32.mrb[0].mxu0
        %668 = vmatprep.mubr.f32.mxu0 0.0
        %669 = vmatmul.mubr.f32.gmra.mrb[0].mxu0 %v589
        %v670 = vpop.f32.mrb[0].mxu0
        %v671 = vadd.f32 %v575, %v670
        %v672 = vpop.f32.mrb[0].mxu0
        %673 = vmatprep.mubr.f32.mxu0 0.0
        %674 = vmatmul.mubr.f32.gmra.mrb[0].mxu0 %v592
        %v675 = vpop.f32.mrb[0].mxu0
        %v676 = vadd.f32 %v580, %v675
        %v677 = vpop.f32.mrb[0].mxu0
        %678 = vdwg.mxu0
        %vm679 = vcmask 125952
        %680 = vst.msk [vmem:[%s355] sm:$0xf] %vm679, %v471
        %681 = vst.msk [vmem:[%s362] sm:$0xf] %vm679, %v551
        %vm682 = vcmask 130048
        %683 = vst.msk [vmem:[%s388] sm:$0xff] %vm682, %v661
        %684 = vst.msk [vmem:[%s388 + $0x8] sm:$0xff] %vm682, %v666
        %685 = vst.msk [vmem:[%s388 + $0x10] sm:$0xff] %vm682, %v671
        %686 = vst.msk [vmem:[%s388 + $0x18] sm:$0xff] %vm682, %v676
        %s687 = sand.u32 %s203, 1
        %s688 = scalar_lea.sflag [#allocation3], %s687
        %s689 = sand.u32 %s203, 1
        %s690 = smul.addr %s689, 4
        %s691 = scalar_lea.vmem [#allocation2], %s690
        %s692 = sand.u32 %s231, 1
        %s693 = scalar_lea.sflag [#allocation5], %s692
        %s694 = sand.u32 %s231, 1
        %s695 = smul.addr %s694, 4
        %s696 = scalar_lea.vmem [#allocation4], %s695
        %p697 = scmp.lt.s32.totalorder %s31, 1
        %s698 = scalar_select %p697, %s31, 1
        %p699 = scmp.lt.s32.totalorder %s32, 0
        %s700 = scalar_select %p699, %s32, 0
        %s701 = smul.addr %s698, 4
        %s702 = sadd.s32 %s700, %s701
        %s703 = smul.addr %s702, 8
        %s704 = scalar_lea.vmem %s9, %s703
        // Predicated region
        $region49: #{tpu_custom_call.1} parent=47 // pred_check
          %p705 = pneg %p213
        $region50: #{tpu_custom_call.1} parent=47 // pred_check_branch
          %707 = sbr.rel (%p705) target = $region52
        $region51: #{tpu_custom_call.1} parent=47 // pred_region
          %s709 = ssub.s32 64, 64
          %710 = vsyncadd %s688, %s709
          %s711 = sadd.s32 %s32, %s31
          %s712 = smul.addr %s711, 64
          %s713 = scalar_lea.hbm %s7, %s712
          %s715 = sshll.u32 %s691, 4
          %s716 = int_to_ptr.vmem [resolvable:$true] %s715
          %718 = dma.vmem_to_hbm [thread:$0]  %s716, 64, %s713, %s688
        $region52: #{tpu_custom_call.1} parent=47 // pred_fallthru
          _
        // Predicated region
        $region53: #{tpu_custom_call.1} parent=47 // pred_check
          %p719 = pneg %p241
        $region54: #{tpu_custom_call.1} parent=47 // pred_check_branch
          %721 = sbr.rel (%p719) target = $region56
        $region55: #{tpu_custom_call.1} parent=47 // pred_region
          %s723 = ssub.s32 64, 64
          %724 = vsyncadd %s693, %s723
          %s725 = sadd.s32 %s32, %s31
          %s726 = smul.addr %s725, 64
          %s727 = scalar_lea.hbm %s8, %s726
          %s729 = sshll.u32 %s696, 4
          %s730 = int_to_ptr.vmem [resolvable:$true] %s729
          %732 = dma.vmem_to_hbm [thread:$0]  %s730, 64, %s727, %s693
        $region56: #{tpu_custom_call.1} parent=47 // pred_fallthru
          _
        // Predicated region
        $region57: #{tpu_custom_call.1} parent=47 // pred_check
          %p733 = pneg %p269
        $region58: #{tpu_custom_call.1} parent=47 // pred_check_branch
          %735 = sbr.rel (%p733) target = $region60
        $region59: #{tpu_custom_call.1} parent=47 // pred_region
          _
        $region60: #{tpu_custom_call.1} parent=47 // pred_fallthru
          _
      $region48: #{tpu_custom_call.1} parent=5 // pred_fallthru
        _
      %p736 = scmp.le.s32.totalorder 2, %s22
      // Predicated region
      $region61: #{tpu_custom_call.1} parent=5 // pred_check
        %p737 = pneg %p736
      $region62: #{tpu_custom_call.1} parent=5 // pred_check_branch
        %739 = sbr.rel (%p737) target = $region64
      $region63: #{tpu_custom_call.1} parent=5 // pred_region
        %s740 = ssub.s32 %s22, 2
        // Predicated region
        $region65: #{tpu_custom_call.1} parent=63 // pred_check
          %p741 = pneg %p219
        $region66: #{tpu_custom_call.1} parent=63 // pred_check_branch
          %743 = sbr.rel (%p741) target = $region68
        $region67: #{tpu_custom_call.1} parent=63 // pred_region
          %s744 = sand.u32 %s204, 1
          %s745 = scalar_lea.sflag [#allocation3], %s744
          %s746 = sand.u32 %s204, 1
          %s747 = smul.addr %s746, 4
          %s748 = scalar_lea.vmem [#allocation2], %s747
          %749 = dma.done %s745, 64
        $region68: #{tpu_custom_call.1} parent=63 // pred_fallthru
          _
        // Predicated region
        $region69: #{tpu_custom_call.1} parent=63 // pred_check
          %p750 = pneg %p247
        $region70: #{tpu_custom_call.1} parent=63 // pred_check_branch
          %752 = sbr.rel (%p750) target = $region72
        $region71: #{tpu_custom_call.1} parent=63 // pred_region
          %s753 = sand.u32 %s232, 1
          %s754 = scalar_lea.sflag [#allocation5], %s753
          %s755 = sand.u32 %s232, 1
          %s756 = smul.addr %s755, 4
          %s757 = scalar_lea.vmem [#allocation4], %s756
          %758 = dma.done %s754, 64
        $region72: #{tpu_custom_call.1} parent=63 // pred_fallthru
          _
        // Predicated region
        $region73: #{tpu_custom_call.1} parent=63 // pred_check
          %p759 = pneg %p275
        $region74: #{tpu_custom_call.1} parent=63 // pred_check_branch
          %761 = sbr.rel (%p759) target = $region76
        $region75: #{tpu_custom_call.1} parent=63 // pred_region
          %p762 = scmp.lt.s32.totalorder %s33, 1
          %s763 = scalar_select %p762, %s33, 1
          %p764 = scmp.lt.s32.totalorder %s34, 0
          %s765 = scalar_select %p764, %s34, 0
          %s766 = smul.addr %s763, 4
          %s767 = sadd.s32 %s765, %s766
          %s768 = smul.addr %s767, 8
          %s769 = scalar_lea.vmem %s9, %s768
        $region76: #{tpu_custom_call.1} parent=63 // pred_fallthru
          _
      $region64: #{tpu_custom_call.1} parent=5 // pred_fallthru
        _
    $region6: #{tpu_custom_call.1} parent=1 // loop_footer
      %s26 = sadd.s32 1, %s22
    $region7: #{tpu_custom_call.1} parent=1 // loop_footer_branch
      %21 = sbr.rel target = $region3
    $region8: #{tpu_custom_call.1} parent=1 // loop_exit
      _
    %770 = vsyncpa [#allocation3], 1
    %s771 = scalar_lea.sflag [#allocation3], 1
    %772 = vsyncpa %s771, 1
    %773 = vsyncpa [#allocation5], 1
    %s774 = scalar_lea.sflag [#allocation5], 1
    %775 = vsyncpa %s774, 1

</llo_original>
